<compile_context>
chip_gen: v6e
topology: v6e:2x2x1
jax: 0.10.0
libtpu: 0.0.40
codegen_flags: <defaults>
</compile_context>

<pallas_src>
import functools

import numpy as np
import jax
import jax.numpy as jnp
from jax.experimental import pallas as pl
from jax.experimental.pallas import tpu as pltpu


# ----------------------------------------------------------------------------
# VMEM budget & tile selection
# ----------------------------------------------------------------------------

def _default_vmem_limit():
    """~75% of physical VMEM, capped at 96 MiB (v5e/v6e -> 96 MiB, v7x -> 48 MiB)."""
    cap = 128 * 1024 * 1024
    try:
        cap = pltpu.get_tpu_info().vmem_capacity_bytes
    except Exception:
        pass
    return max(32 * 1024 * 1024, min(96 * 1024 * 1024, (cap * 3) // 4))


_VMEM_LIMIT = _default_vmem_limit()


def _pick_row_tile(M):
    """Row tile: biggest MXU-friendly divisor, a single full-row tile for small M,
    else 128 with a cdiv grid (edge blocks use Pallas' masked writes, no host pad)."""
    for t in (512, 256, 128):
        if M % t == 0:
            return t
    if M <= 512:
        return M
    return 128


def _pick_tile(dim):
    """Tile for an N/K axis: a 128-multiple divisor if one exists, else full dim."""
    for t in (512, 256, 128):
        if dim % t == 0:
            return t
    return dim


# ----------------------------------------------------------------------------
# Pallas kernels
# ----------------------------------------------------------------------------

def _linear_kernel(*refs, activation, has_residual):
    """Tiled matmul: grid (Mt, Nt, Kt); f32 accumulator; bias/GELU/residual epilogue."""
    if has_residual:
        x_ref, w_ref, b_ref, res_ref, o_ref, acc_ref = refs
    else:
        x_ref, w_ref, b_ref, o_ref, acc_ref = refs
        res_ref = None

    @pl.when(pl.program_id(2) == 0)
    def _():
        acc_ref[...] = jnp.zeros_like(acc_ref)

    acc_ref[...] += jnp.dot(x_ref[...].astype(jnp.bfloat16), w_ref[...],
                            preferred_element_type=jnp.float32)

    @pl.when(pl.program_id(2) == pl.num_programs(2) - 1)
    def _():
        y = acc_ref[...] + b_ref[...].astype(jnp.float32)
        if activation == "gelu":
            y = jax.nn.gelu(y, approximate=False)   # exact (erf) GELU == nn.GELU
        if has_residual:
            y = y + res_ref[...].astype(jnp.float32)
        o_ref[...] = y.astype(o_ref.dtype)


def _ln_linear_kernel(x_ref, g_ref, bt_ref, w_ref, b_ref, o_ref, xn_ref,
                      *, eps, activation):
    """Fused LayerNorm (f32 stats) -> bf16 matmul -> bias (-> GELU).
    LN is computed once per row tile (j == 0) into a bf16 VMEM scratch and reused
    across all N tiles; the x block is j-invariant so it is not re-DMA'd either."""
    @pl.when(pl.program_id(1) == 0)
    def _():
        x = x_ref[...].astype(jnp.float32)
        mu = jnp.mean(x, axis=-1, keepdims=True)
        xc = x - mu
        var = jnp.mean(xc * xc, axis=-1, keepdims=True)
        xn = xc * jax.lax.rsqrt(var + eps)
        xn = xn * g_ref[...].astype(jnp.float32) + bt_ref[...].astype(jnp.float32)
        xn_ref[...] = xn.astype(jnp.bfloat16)

    y = jnp.dot(xn_ref[...], w_ref[...], preferred_element_type=jnp.float32)
    y = y + b_ref[...].astype(jnp.float32)
    if activation == "gelu":
        y = jax.nn.gelu(y, approximate=False)
    o_ref[...] = y.astype(o_ref.dtype)


def _layernorm_kernel(x_ref, g_ref, b_ref, o_ref, *, eps):
    x = x_ref[...].astype(jnp.float32)
    mu = jnp.mean(x, axis=-1, keepdims=True)
    xc = x - mu
    var = jnp.mean(xc * xc, axis=-1, keepdims=True)
    y = xc * jax.lax.rsqrt(var + eps)
    o_ref[...] = (y * g_ref[...] + b_ref[...]).astype(o_ref.dtype)


def _attention_kernel(qkv_ref, wo_ref, bo_ref, res_ref, o_ref, *, heads, scale):
    """Per-batch fused MHA: heads sliced from the lane-dense (S, 3D) block; softmax
    in f32 with EUP reciprocal; softmax scale folded into q; each head's output is
    accumulated straight into the output projection (no per-head concat); residual
    + bias epilogue fused. Output stored bf16."""
    qkv = qkv_ref[0]                              # (S, 3D) bf16
    d3 = qkv.shape[-1]
    D = d3 // 3
    Dh = D // heads
    S = qkv.shape[0]

    proj = jnp.zeros((S, D), jnp.float32)
    for h in range(heads):
        q = qkv[:, h * Dh:(h + 1) * Dh] * scale            # scale folded into q
        k = qkv[:, D + h * Dh:D + (h + 1) * Dh]
        v = qkv[:, 2 * D + h * Dh:2 * D + (h + 1) * Dh]
        # Contract the last dims directly (q @ k^T on the MXU, no explicit transpose).
        s = jax.lax.dot_general(q, k, (((1,), (1,)), ((), ())),
                                preferred_element_type=jnp.float32)
        s = s - jnp.max(s, axis=-1, keepdims=True)
        p = jnp.exp(s)
        p = p * pl.reciprocal(jnp.sum(p, axis=-1, keepdims=True), approx=True)
        o_h = jnp.dot(p.astype(jnp.bfloat16), v, preferred_element_type=jnp.float32)
        # Accumulate this head's contribution into the output projection.
        proj = proj + jnp.dot(o_h.astype(jnp.bfloat16),
                              wo_ref[h * Dh:(h + 1) * Dh, :],
                              preferred_element_type=jnp.float32)

    out = res_ref[0].astype(jnp.float32) + proj + bo_ref[...].astype(jnp.float32)
    o_ref[0] = out.astype(o_ref.dtype)


# ----------------------------------------------------------------------------
# Pallas wrappers
# ----------------------------------------------------------------------------

def pallas_linear2d(x, w, b=None, activation=None, residual=None,
                    out_dtype=jnp.bfloat16):
    """x: (M, K) (any dtype; cast to bf16 in-kernel); w: (K, N) bf16; b: (N,) or None;
    residual: (M, N) or None (read at its stored dtype, upcast in epilogue)."""
    M, K = x.shape
    _, N = w.shape
    tm = _pick_row_tile(M)
    tn = _pick_tile(N)
    tk = _pick_tile(K)

    b2 = (jnp.zeros((1, N), jnp.float32) if b is None
          else b.reshape(1, N).astype(jnp.float32))

    in_specs = [
        pl.BlockSpec((tm, tk), lambda i, j, k: (i, k)),
        pl.BlockSpec((tk, tn), lambda i, j, k: (k, j)),
        pl.BlockSpec((1, tn), lambda i, j, k: (0, j)),
    ]
    args = [x, w, b2]
    if residual is not None:
        in_specs.append(pl.BlockSpec((tm, tn), lambda i, j, k: (i, j)))
        args.append(residual)

    kernel = functools.partial(_linear_kernel, activation=activation,
                               has_residual=residual is not None)
    return pl.pallas_call(
        kernel,
        out_shape=jax.ShapeDtypeStruct((M, N), out_dtype),
        grid=(pl.cdiv(M, tm), N // tn, K // tk),
        in_specs=in_specs,
        out_specs=pl.BlockSpec((tm, tn), lambda i, j, k: (i, j)),
        scratch_shapes=[pltpu.VMEM((tm, tn), jnp.float32)],
        compiler_params=pltpu.CompilerParams(
            dimension_semantics=("parallel", "parallel", "arbitrary"),
            vmem_limit_bytes=_VMEM_LIMIT),
    )(*args)


def pallas_ln_linear2d(x, g, bt, w, b=None, activation=None, eps=1e-6,
                       out_dtype=jnp.bfloat16):
    """Fused LayerNorm + Linear. x: (M, K) bf16/f32 (stats in f32 in-kernel);
    w: (K, N) bf16 (K kept whole per tile)."""
    M, K = x.shape
    _, N = w.shape
    tm = _pick_row_tile(M)
    tn = _pick_tile(N)

    g2 = g.reshape(1, K).astype(jnp.float32)
    bt2 = bt.reshape(1, K).astype(jnp.float32)
    b2 = (jnp.zeros((1, N), jnp.float32) if b is None
          else b.reshape(1, N).astype(jnp.float32))

    kernel = functools.partial(_ln_linear_kernel, eps=eps, activation=activation)
    return pl.pallas_call(
        kernel,
        out_shape=jax.ShapeDtypeStruct((M, N), out_dtype),
        grid=(pl.cdiv(M, tm), N // tn),
        in_specs=[
            pl.BlockSpec((tm, K), lambda i, j: (i, 0)),
            pl.BlockSpec((1, K), lambda i, j: (0, 0)),
            pl.BlockSpec((1, K), lambda i, j: (0, 0)),
            pl.BlockSpec((K, tn), lambda i, j: (0, j)),
            pl.BlockSpec((1, tn), lambda i, j: (0, j)),
        ],
        out_specs=pl.BlockSpec((tm, tn), lambda i, j: (i, j)),
        scratch_shapes=[pltpu.VMEM((tm, K), jnp.bfloat16)],
        compiler_params=pltpu.CompilerParams(
            dimension_semantics=("parallel", "arbitrary"),
            vmem_limit_bytes=_VMEM_LIMIT),
    )(x, g2, bt2, w, b2)


def pallas_layernorm2d(x, g, b, eps=1e-6, out_dtype=jnp.bfloat16):
    M, D = x.shape
    tm = _pick_row_tile(M)
    kernel = functools.partial(_layernorm_kernel, eps=eps)
    return pl.pallas_call(
        kernel,
        out_shape=jax.ShapeDtypeStruct((M, D), out_dtype),
        grid=(pl.cdiv(M, tm),),
        in_specs=[
            pl.BlockSpec((tm, D), lambda i: (i, 0)),
            pl.BlockSpec((1, D), lambda i: (0, 0)),
            pl.BlockSpec((1, D), lambda i: (0, 0)),
        ],
        out_specs=pl.BlockSpec((tm, D), lambda i: (i, 0)),
        compiler_params=pltpu.CompilerParams(
            dimension_semantics=("parallel",),
            vmem_limit_bytes=_VMEM_LIMIT),
    )(x, g.reshape(1, D).astype(jnp.float32), b.reshape(1, D).astype(jnp.float32))


def pallas_attention_block(x_residual, qkv, wo, bo, heads):
    """x_residual: (B, S, D) bf16; qkv: (B, S, 3D) bf16; wo: (D, D) bf16; bo: (D,).
    Returns bf16 x_residual + out_proj(MHA(qkv))."""
    B, S, D3 = qkv.shape
    D = D3 // 3
    Dh = D // heads
    if qkv.dtype != jnp.bfloat16:
        qkv = qkv.astype(jnp.bfloat16)
    if x_residual.dtype != jnp.bfloat16:
        x_residual = x_residual.astype(jnp.bfloat16)
    kernel = functools.partial(_attention_kernel, heads=heads, scale=Dh ** -0.5)
    return pl.pallas_call(
        kernel,
        out_shape=jax.ShapeDtypeStruct((B, S, D), jnp.bfloat16),
        grid=(B,),
        in_specs=[
            pl.BlockSpec((1, S, D3), lambda b: (b, 0, 0)),
            pl.BlockSpec((D, D), lambda b: (0, 0)),
            pl.BlockSpec((1, D), lambda b: (0, 0)),
            pl.BlockSpec((1, S, D), lambda b: (b, 0, 0)),
        ],
        out_specs=pl.BlockSpec((1, S, D), lambda b: (b, 0, 0)),
        compiler_params=pltpu.CompilerParams(
            dimension_semantics=("parallel",),
            vmem_limit_bytes=_VMEM_LIMIT),
    )(qkv, wo, bo.reshape(1, D).astype(jnp.float32), x_residual)


# ----------------------------------------------------------------------------
# High-level ops
# ----------------------------------------------------------------------------

def linear(x, w, b=None, activation=None, residual=None, out_dtype=jnp.bfloat16):
    shp = x.shape
    x2 = x.reshape(-1, shp[-1])
    res2 = residual.reshape(-1, w.shape[1]) if residual is not None else None
    out = pallas_linear2d(x2, w, b, activation, res2, out_dtype=out_dtype)
    return out.reshape(shp[:-1] + (w.shape[1],))


def ln_linear(x, g, bt, w, b=None, activation=None, eps=1e-6,
              out_dtype=jnp.bfloat16):
    shp = x.shape
    out = pallas_ln_linear2d(x.reshape(-1, shp[-1]), g, bt, w, b, activation, eps,
                             out_dtype=out_dtype)
    return out.reshape(shp[:-1] + (w.shape[1],))


def layernorm(x, g, b, eps=1e-6, out_dtype=jnp.bfloat16):
    shp = x.shape
    out = pallas_layernorm2d(x.reshape(-1, shp[-1]), g, b, eps, out_dtype=out_dtype)
    return out.reshape(shp)


def transformer_block(x, blk, heads, eps):
    """Pre-norm transformer block on a bf16 residual stream; encoder & decoder share it."""
    qkv = ln_linear(x, blk["ln1_g"], blk["ln1_b"], blk["qkv_w"], blk["qkv_b"], eps=eps)
    x = pallas_attention_block(x, qkv, blk["proj_w"], blk["proj_b"], heads)
    h = ln_linear(x, blk["ln2_g"], blk["ln2_b"], blk["fc1_w"], blk["fc1_b"],
                  activation="gelu", eps=eps)
    x = linear(h, blk["fc2_w"], blk["fc2_b"], residual=x, out_dtype=jnp.bfloat16)
    return x


def gather_rows(x, mask_np, select_true):
    """Emulates torch x[mask].reshape(B, -1, C) with equal counts per row."""
    sel = mask_np if select_true else ~mask_np
    B = sel.shape[0]
    idx = np.stack([np.nonzero(sel[b])[0] for b in range(B)], axis=0)
    idx = jnp.asarray(idx, dtype=jnp.int32)
    return x[jnp.arange(B)[:, None], idx]


def get_sinusoid_encoding_table(n_position, d_hid):
    pos = np.arange(n_position, dtype=np.float64)[:, None]
    i = np.arange(d_hid)
    denom = np.power(10000.0, 2.0 * (i // 2) / d_hid)
    table = pos / denom
    table[:, 0::2] = np.sin(table[:, 0::2])
    table[:, 1::2] = np.cos(table[:, 1::2])
    return jnp.asarray(table[None], dtype=jnp.float32)  # (1, N, d)


# ----------------------------------------------------------------------------
# Parameter initialization (synthetic, deterministic; weights in (K, N) bf16)
# ----------------------------------------------------------------------------

def _make_key_iter(key):
    state = {"k": key}

    def next_key():
        state["k"], sub = jax.random.split(state["k"])
        return sub

    return next_key


def _normal(nk, shape, std=0.02):
    return std * jax.random.normal(nk(), shape, jnp.float32)


def init_params(key, cfg):
    nk = _make_key_iter(key)
    De, Dd = cfg["D_e"], cfg["D_d"]
    C, ph, T = cfg["C"], cfg["patch"], cfg["T"]
    ppf, num_patches, R = cfg["ppf"], cfg["num_patches"], cfg["mlp_ratio"]

    def w_kn(k_dim, n_dim):                      # pre-transposed (K, N), bf16
        return _normal(nk, (k_dim, n_dim)).astype(jnp.bfloat16)

    p = {}
    p["conv_w"] = w_kn(C * ph * ph, De)          # conv1-as-matmul, bias=False
    p["class_embedding"] = _normal(nk, (De,))
    p["pos_emb"] = _normal(nk, (1 + ppf, De))
    p["temporal_emb"] = _normal(nk, (T, De))
    p["ln_pre_g"] = jnp.ones((De,), jnp.float32)
    p["ln_pre_b"] = jnp.zeros((De,), jnp.float32)

    def make_block(D, qkv_bias):
        return {
            "ln1_g": jnp.ones((D,), jnp.float32), "ln1_b": jnp.zeros((D,), jnp.float32),
            "qkv_w": w_kn(D, 3 * D),
            "qkv_b": jnp.zeros((3 * D,), jnp.float32) if qkv_bias else None,
            "proj_w": w_kn(D, D), "proj_b": jnp.zeros((D,), jnp.float32),
            "ln2_g": jnp.ones((D,), jnp.float32), "ln2_b": jnp.zeros((D,), jnp.float32),
            "fc1_w": w_kn(D, R * D), "fc1_b": jnp.zeros((R * D,), jnp.float32),
            "fc2_w": w_kn(R * D, D), "fc2_b": jnp.zeros((D,), jnp.float32),
        }

    p["enc_blocks"] = [make_block(De, qkv_bias=True) for _ in range(cfg["L_e"])]
    p["ln_post_g"] = jnp.ones((De,), jnp.float32)
    p["ln_post_b"] = jnp.zeros((De,), jnp.float32)
    p["e2d_w"] = w_kn(De, Dd)                    # encoder_to_decoder, bias=False
    p["mask_token"] = _normal(nk, (Dd,))
    p["pos_embed_dec"] = get_sinusoid_encoding_table(num_patches, Dd)
    p["dec_blocks"] = [make_block(Dd, qkv_bias=False) for _ in range(cfg["L_d"])]
    p["dec_norm_g"] = jnp.ones((Dd,), jnp.float32)
    p["dec_norm_b"] = jnp.zeros((Dd,), jnp.float32)
    p["head_w"] = w_kn(Dd, cfg["num_classes_dec"])
    p["head_b"] = jnp.zeros((cfg["num_classes_dec"],), jnp.float32)
    return p


# ----------------------------------------------------------------------------
# Forward pass (mirrors PretrainVisionTransformerCLIP2MAE.forward)
# ----------------------------------------------------------------------------

def forward(params, x, mask_np, cfg):
    """x: (B, C, T, H, W) float32; mask_np: numpy bool (B, 1 + num_patches)."""
    B, C, T, H, W = x.shape
    ph = cfg["patch"]
    nh, nw = H // ph, W // ph
    ppf = nh * nw
    De, Dd = cfg["D_e"], cfg["D_d"]

    # ---------------- encoder (num_frames > 1, standard conv1 path) ----------------
    xt = jnp.transpose(x, (0, 2, 1, 3, 4)).reshape(B * T, C, H, W)
    patches = (xt.reshape(B * T, C, nh, ph, nw, ph)
                 .transpose(0, 2, 4, 1, 3, 5)
                 .reshape(B * T * nh * nw, C * ph * ph)).astype(jnp.bfloat16)
    tok = pallas_linear2d(patches, params["conv_w"], out_dtype=jnp.float32)
    tok = tok.reshape(B, T * ppf, De)

    cls = jnp.broadcast_to(params["class_embedding"], (B, 1, De))
    xseq = jnp.concatenate([cls, tok], axis=1)                      # (B, 1 + T*ppf, De)

    cls_pe = params["pos_emb"][0:1]
    tile_pos = jnp.tile(params["pos_emb"][1:], (T, 1))
    tile_temp = jnp.repeat(params["temporal_emb"], ppf, axis=0)
    total_pe = jnp.concatenate([cls_pe, tile_pos + tile_temp], axis=0)
    xseq = xseq + total_pe[None]

    # patch_dropout = 0 and eval-mode dropouts -> identity
    xseq = layernorm(xseq, params["ln_pre_g"], params["ln_pre_b"], eps=1e-6,
                     out_dtype=jnp.bfloat16)

    x_vis = gather_rows(xseq, mask_np, select_true=False)           # visible tokens

    for blk in params["enc_blocks"]:
        x_vis = transformer_block(x_vis, blk, cfg["H_e"], eps=1e-6)

    # ---------------- top-level glue + decoder ----------------
    x_vis = x_vis[:, 1:, :]                                          # drop cls token
    mask_p = mask_np[:, 1:]
    # fused ln_post + encoder_to_decoder (no bias)
    x_vis = ln_linear(x_vis, params["ln_post_g"], params["ln_post_b"],
                      params["e2d_w"], None, eps=1e-6)               # (B, Nvis, Dd) bf16

    pos_embed = jnp.broadcast_to(params["pos_embed_dec"], (B, cfg["num_patches"], Dd))
    pos_vis = gather_rows(pos_embed, mask_p, select_true=False)
    pos_msk = gather_rows(pos_embed, mask_p, select_true=True)
    x_full = jnp.concatenate(
        [x_vis.astype(jnp.float32) + pos_vis,
         params["mask_token"][None, None, :] + pos_msk],
        axis=1).astype(jnp.bfloat16)

    xd = x_full
    for blk in params["dec_blocks"]:
        xd = transformer_block(xd, blk, cfg["H_d"], eps=1e-5)        # decoder LN eps

    n_mask = pos_msk.shape[1]
    out = xd[:, -n_mask:]
    # fused decoder norm + classification head (f32 output)
    out = ln_linear(out, params["dec_norm_g"], params["dec_norm_b"],
                    params["head_w"], params["head_b"], eps=1e-5,
                    out_dtype=jnp.float32)
    return out                                                       # (B, n_mask, classes)


# ----------------------------------------------------------------------------
# Main
# ----------------------------------------------------------------------------

if __name__ == "__main__":
    B, C, T = 2, 3, 2
    img, patch = 16, 8
    nh = img // patch
    ppf = nh * nh                      # 4 patches per frame
    num_patches = T * ppf              # 8 patch tokens (no cls)

    cfg = dict(
        B=B, C=C, T=T, patch=patch, ppf=ppf, num_patches=num_patches,
        D_e=32, H_e=4, L_e=2, mlp_ratio=4,
        D_d=32, H_d=4, L_d=2,
        num_classes_dec=C * patch * patch,   # 192 (tubelet_size=1)
    )

    key = jax.random.PRNGKey(0)
    k_param, k_x = jax.random.split(key)
    params = init_params(k_param, cfg)
    x = jax.random.normal(k_x, (B, C, T, img, img), jnp.float32)

    # Boolean mask (B, 1 + num_patches); cls always visible; half the patches masked.
    rng = np.random.RandomState(0)
    mask = np.zeros((B, 1 + num_patches), dtype=bool)
    for b in range(B):
        perm = rng.permutation(num_patches)
        mask[b, 1 + perm[: num_patches // 2]] = True

    out = forward(params, x, mask, cfg)
    out = jax.block_until_ready(out)
    assert out.shape == (B, num_patches // 2, cfg["num_classes_dec"]), out.shape
    assert bool(jnp.all(jnp.isfinite(out)))
    print("KERNEL_OK")
</pallas_src>

<mosaic_0001>
module attributes {stable_mosaic.version = 11 : i64} {
  func.func @_linear_kernel(%arg0: i32, %arg1: i32, %arg2: i32, %arg3: memref<16x192xbf16, #tpu.memory_space<vmem>>, %arg4: memref<192x32xbf16, #tpu.memory_space<vmem>>, %arg5: memref<1x32xf32, #tpu.memory_space<vmem>>, %arg6: memref<16x32xf32, #tpu.memory_space<vmem>>, %arg7: memref<16x32xf32, #tpu.memory_space<vmem>>) attributes {dimension_semantics = [#tpu.dimension_semantics<parallel>, #tpu.dimension_semantics<parallel>, #tpu.dimension_semantics<arbitrary>], iteration_bounds = array<i64: 1, 1, 1>, scalar_prefetch = 0 : i64, scratch_operands = 1 : i64, tpu.core_type = #tpu.core_type<tc>, window_params = [{transform_indices = @transform_0, window_bounds = array<i64: 16, 192>}, {transform_indices = @transform_1, window_bounds = array<i64: 192, 32>}, {transform_indices = @transform_2, window_bounds = array<i64: 1, 32>}, {transform_indices = @transform_3, window_bounds = array<i64: 16, 32>}]} {
    %c0_i32 = arith.constant 0 : i32
    %0 = arith.cmpi eq, %arg2, %c0_i32 : i32
    %1 = arith.extui %0 : i1 to i32
    %c0_i32_0 = arith.constant 0 : i32
    %2 = arith.cmpi ne, %1, %c0_i32_0 : i32
    scf.if %2 {
      %cst_10 = arith.constant 0.000000e+00 : f32
      %12 = vector.broadcast %cst_10 : f32 to vector<16x32xf32>
      %c0_11 = arith.constant 0 : index
      %c0_12 = arith.constant 0 : index
      %13 = vector.load %arg7[%c0_11, %c0_12] : memref<16x32xf32, #tpu.memory_space<vmem>>, vector<16x32xf32>
      tpu.vector_store %arg7[%c0_11, %c0_12], %12 {strides = array<i32>} : memref<16x32xf32, #tpu.memory_space<vmem>>, vector<16x32xf32>,
    } else {
    }
    %c0 = arith.constant 0 : index
    %c0_1 = arith.constant 0 : index
    %3 = vector.load %arg7[%c0, %c0_1] : memref<16x32xf32, #tpu.memory_space<vmem>>, vector<16x32xf32>
    %c0_2 = arith.constant 0 : index
    %c0_3 = arith.constant 0 : index
    %4 = vector.load %arg3[%c0_2, %c0_3] : memref<16x192xbf16, #tpu.memory_space<vmem>>, vector<16x192xbf16>
    %c0_4 = arith.constant 0 : index
    %c0_5 = arith.constant 0 : index
    %5 = vector.load %arg4[%c0_4, %c0_5] : memref<192x32xbf16, #tpu.memory_space<vmem>>, vector<192x32xbf16>
    %cst = arith.constant dense<0.000000e+00> : vector<16x32xf32>
    %6 = tpu.matmul %4, %5, %cst {dimension_numbers = #tpu.dot_dimension_numbers<[1], [0], [0], [1], [0, 0, 1, 1], [], []>} : vector<16x192xbf16>, vector<192x32xbf16>, vector<16x32xf32> -> vector<16x32xf32>
    %7 = arith.addf %3, %6 : vector<16x32xf32>
    %c0_6 = arith.constant 0 : index
    %c0_7 = arith.constant 0 : index
    %8 = vector.load %arg7[%c0_6, %c0_7] : memref<16x32xf32, #tpu.memory_space<vmem>>, vector<16x32xf32>
    tpu.vector_store %arg7[%c0_6, %c0_7], %7 {strides = array<i32>} : memref<16x32xf32, #tpu.memory_space<vmem>>, vector<16x32xf32>,
    %c0_i32_8 = arith.constant 0 : i32
    %9 = arith.cmpi eq, %arg2, %c0_i32_8 : i32
    %10 = arith.extui %9 : i1 to i32
    %c0_i32_9 = arith.constant 0 : i32
    %11 = arith.cmpi ne, %10, %c0_i32_9 : i32
    scf.if %11 {
      %c0_10 = arith.constant 0 : index
      %c0_11 = arith.constant 0 : index
      %12 = vector.load %arg7[%c0_10, %c0_11] : memref<16x32xf32, #tpu.memory_space<vmem>>, vector<16x32xf32>
      %c0_12 = arith.constant 0 : index
      %c0_13 = arith.constant 0 : index
      %13 = vector.load %arg5[%c0_12, %c0_13] : memref<1x32xf32, #tpu.memory_space<vmem>>, vector<1x32xf32>
      %14 = vector.broadcast %13 : vector<1x32xf32> to vector<16x32xf32>
      %15 = arith.addf %12, %14 : vector<16x32xf32>
      %c0_14 = arith.constant 0 : index
      %c0_15 = arith.constant 0 : index
      %16 = vector.load %arg6[%c0_14, %c0_15] : memref<16x32xf32, #tpu.memory_space<vmem>>, vector<16x32xf32>
      tpu.vector_store %arg6[%c0_14, %c0_15], %15 {strides = array<i32>} : memref<16x32xf32, #tpu.memory_space<vmem>>, vector<16x32xf32>,
    } else {
    }
    return
  }
  func.func @transform_0(%arg0: i32, %arg1: i32, %arg2: i32) -> (i32, i32) {
    %c0_i32 = arith.constant 0 : i32
    return %arg0, %arg2 : i32, i32
  }
  func.func @transform_1(%arg0: i32, %arg1: i32, %arg2: i32) -> (i32, i32) {
    %c0_i32 = arith.constant 0 : i32
    return %arg2, %arg1 : i32, i32
  }
  func.func @transform_2(%arg0: i32, %arg1: i32, %arg2: i32) -> (i32, i32) {
    %c0_i32 = arith.constant 0 : i32
    %c0_i32_0 = arith.constant 0 : i32
    return %c0_i32, %arg1 : i32, i32
  }
  func.func @transform_3(%arg0: i32, %arg1: i32, %arg2: i32) -> (i32, i32) {
    %c0_i32 = arith.constant 0 : i32
    return %arg0, %arg1 : i32, i32
  }
}

</mosaic_0001>

<llo_original>
// kernel: tpu_custom_call.1
$region0: #{tpu_custom_call.1}
  #allocation0 [shape = 'u32[]', space=smem, size = 0x4, offset = 0x4, fixed_abs, tag = 'smem constant byte address 0x4 - core index']
  #allocation1 [shape = 'u32[144,128]{1,0:T(1,128)}', space=vmem, size = 0x12000, scoped, tag = 'internal scratch']
  #allocation2 [shape = 'f32[16,32]{1,0:T(8,128)}', space=vmem, size = 0x2000, scoped, tag = 'scratch operand']
  %s0 = inlined_call_operand.vmem [shape: bf16[16,192], index: 0, kind: input, shape index: {}]
  %s1 = inlined_call_operand.vmem [shape: bf16[192,32], index: 1, kind: input, shape index: {}]
  %s2 = inlined_call_operand.vmem [shape: f32[1,32], index: 2, kind: input, shape index: {}]
  %s3 = inlined_call_operand.hbm [shape: f32[16,32], index: 3, kind: output, shape index: {}]
  %s4 = sld [smem:[#allocation0]]
  $region30: #{tpu_custom_call.1} parent=0
    _
  %s6 = ssub.s32 1, %s4
  %s7 = scalar_select 0, %s6, %s4
  $region1: #{tpu_custom_call.1} parent=0
    #allocation3 [shape = 'u8[8192]{0}', space=vmem, size = 0x2000, scoped, tag = 'output window, operand 0, single buffered']
    #allocation4 [shape = 's32[1]{0}', space=sflag, size = 0x4, scoped, tag = 'scoped memory for tpu_custom_call.1']
    %8 = vsyncpa [#allocation4], 0
    // Predicated region
    $region2: #{tpu_custom_call.1} parent=1 // pred_check
      _
    $region3: #{tpu_custom_call.1} parent=1 // pred_check_branch
      %10 = sbr.rel (0) target = $region5
    $region4: #{tpu_custom_call.1} parent=1 // pred_region
      _
    $region5: #{tpu_custom_call.1} parent=1 // pred_fallthru
      _
    // Predicated region
    $region6: #{tpu_custom_call.1} parent=1 // pred_check
      _
    $region7: #{tpu_custom_call.1} parent=1 // pred_check_branch
      %12 = sbr.rel (0) target = $region9
    $region8: #{tpu_custom_call.1} parent=1 // pred_region
      _
    $region9: #{tpu_custom_call.1} parent=1 // pred_fallthru
      _
    // Predicated region
    $region10: #{tpu_custom_call.1} parent=1 // pred_check
      _
    $region11: #{tpu_custom_call.1} parent=1 // pred_check_branch
      %14 = sbr.rel (0) target = $region13
    $region12: #{tpu_custom_call.1} parent=1 // pred_region
      _
    $region13: #{tpu_custom_call.1} parent=1 // pred_fallthru
      _
    %p16 = scmp.eq.s32.totalorder 0, 0
    // Predicated region
    $region14: #{tpu_custom_call.1} parent=1 // pred_check
      %p17 = pneg %p16
    $region15: #{tpu_custom_call.1} parent=1 // pred_check_branch
      %19 = sbr.rel (%p17) target = $region17
    $region16: #{tpu_custom_call.1} parent=1 // pred_region
      %vm20 = vcmask 261120
      %21 = vst.msk [vmem:[#allocation2] sm:$0xff] %vm20, 0.0
      %22 = vst.msk [vmem:[#allocation2 + $0x8] sm:$0xff] %vm20, 0.0
    $region17: #{tpu_custom_call.1} parent=1 // pred_fallthru
      _
    %v23 = vld [vmem:[#allocation2] sm:$0xff]
    %v24 = vld [vmem:[#allocation2 + $0x8] sm:$0xff]
    %v25 = vld [vmem:[%s0] sm:$0xff]
    %v26 = vld [vmem:[%s0 + $0x8] sm:$0xff]
    %v27 = vld [vmem:[%s1] sm:$0xf]
    %v28 = vld [vmem:[%s1 + $0x4] sm:$0xf]
    %v29 = vld [vmem:[%s1 + $0x8] sm:$0xf]
    %v30 = vld [vmem:[%s1 + $0xc] sm:$0xf]
    %v31 = vld [vmem:[%s1 + $0x10] sm:$0xf]
    %v32 = vld [vmem:[%s1 + $0x14] sm:$0xf]
    %v33 = vld [vmem:[%s1 + $0x18] sm:$0xf]
    %v34 = vld [vmem:[%s1 + $0x1c] sm:$0xf]
    %v35 = vld [vmem:[%s1 + $0x20] sm:$0xf]
    %v36 = vld [vmem:[%s1 + $0x24] sm:$0xf]
    %v37 = vld [vmem:[%s1 + $0x28] sm:$0xf]
    %v38 = vld [vmem:[%s1 + $0x2c] sm:$0xf]
    %v39 = vld [vmem:[%s1 + $0x30] sm:$0xf]
    %v40 = vld [vmem:[%s1 + $0x34] sm:$0xf]
    %v41 = vld [vmem:[%s1 + $0x38] sm:$0xf]
    %v42 = vld [vmem:[%s1 + $0x3c] sm:$0xf]
    %v43 = vld [vmem:[%s1 + $0x40] sm:$0xf]
    %v44 = vld [vmem:[%s1 + $0x44] sm:$0xf]
    %v45 = vld [vmem:[%s1 + $0x48] sm:$0xf]
    %v46 = vld [vmem:[%s1 + $0x4c] sm:$0xf]
    %v47 = vld [vmem:[%s1 + $0x50] sm:$0xf]
    %v48 = vld [vmem:[%s1 + $0x54] sm:$0xf]
    %v49 = vld [vmem:[%s1 + $0x58] sm:$0xf]
    %v50 = vld [vmem:[%s1 + $0x5c] sm:$0xf]
    %v53 = vunpack.c.l.b16 %v25
    %v54 = vunpack.c.h.b16 %v25
    %v55 = vunpack.c.l.b16 %v26
    %v56 = vunpack.c.h.b16 %v26
    %v57 = vpack.c.b16 %v55, %v53
    %v58 = vpack.c.b16 %v56, %v54
    %v84 = vunpack.c.l.b16 %v27
    %v85 = vunpack.c.l.b16 %v28
    %v86 = vunpack.c.l.b16 %v29
    %v87 = vunpack.c.l.b16 %v30
    %v88 = vunpack.c.l.b16 %v31
    %v89 = vunpack.c.l.b16 %v32
    %v90 = vunpack.c.l.b16 %v33
    %v91 = vunpack.c.l.b16 %v34
    %v92 = vunpack.c.l.b16 %v35
    %v93 = vunpack.c.l.b16 %v36
    %v94 = vunpack.c.l.b16 %v37
    %v95 = vunpack.c.l.b16 %v38
    %v96 = vunpack.c.l.b16 %v39
    %v97 = vunpack.c.l.b16 %v40
    %v98 = vunpack.c.l.b16 %v41
    %v99 = vunpack.c.l.b16 %v42
    %v100 = vunpack.c.l.b16 %v43
    %v101 = vunpack.c.l.b16 %v44
    %v102 = vunpack.c.l.b16 %v45
    %v103 = vunpack.c.l.b16 %v46
    %v104 = vunpack.c.l.b16 %v47
    %v105 = vunpack.c.l.b16 %v48
    %v106 = vunpack.c.l.b16 %v49
    %v107 = vunpack.c.l.b16 %v50
    %v108 = vpack.c.b16 %v85, %v84
    %v109 = vpack.c.b16 %v87, %v86
    %v110 = vpack.c.b16 %v89, %v88
    %v111 = vpack.c.b16 %v91, %v90
    %v112 = vpack.c.b16 %v93, %v92
    %v113 = vpack.c.b16 %v95, %v94
    %v114 = vpack.c.b16 %v97, %v96
    %v115 = vpack.c.b16 %v99, %v98
    %v116 = vpack.c.b16 %v101, %v100
    %v117 = vpack.c.b16 %v103, %v102
    %v118 = vpack.c.b16 %v105, %v104
    %v119 = vpack.c.b16 %v107, %v106
    %vm132 = vcmask 523264
    %v134 = vsel %vm132, %v58, 0
    %136 = vmatprep.subr.bf16.mxu0 0
    %137 = vmatpush1.bf16.msra.mxu0 %v115
    %138 = vmatprep.subr.bf16.mxu0 0
    %139 = vmatpush1.bf16.msra.mxu0 %v114
    %140 = vmatprep.subr.bf16.mxu0 0
    %141 = vmatpush1.bf16.msra.mxu0 %v113
    %142 = vmatprep.subr.bf16.mxu0 0
    %143 = vmatpush1.bf16.msra.mxu0 %v112
    %144 = vmatprep.subr.bf16.mxu0 0
    %145 = vmatpush1.bf16.msra.mxu0 %v111
    %146 = vmatprep.subr.bf16.mxu0 0
    %147 = vmatpush1.bf16.msra.mxu0 %v110
    %148 = vmatprep.subr.bf16.mxu0 0
    %149 = vmatpush1.bf16.msra.mxu0 %v109
    %150 = vmatprep.subr.bf16.mxu0 0
    %151 = vmatpush1.bf16.msra.mxu0 %v108
    %152 = vmatprep.subr.bf16.mxu0 0
    %153 = vmatpush2.bf16.msra.mxu0 0
    %154 = vmatprep.subr.bf16.mxu0 0
    %155 = vmatpush2.bf16.msra.mxu0 0
    %156 = vmatprep.subr.bf16.mxu0 0
    %157 = vmatpush2.bf16.msra.mxu0 0
    %158 = vmatprep.subr.bf16.mxu0 0
    %159 = vmatpush2.bf16.msra.mxu0 0
    %160 = vmatprep.subr.bf16.mxu0 0
    %161 = vmatpush2.bf16.msra.mxu0 %v119
    %162 = vmatprep.subr.bf16.mxu0 0
    %163 = vmatpush2.bf16.msra.mxu0 %v118
    %164 = vmatprep.subr.bf16.mxu0 0
    %165 = vmatpush2.bf16.msra.mxu0 %v117
    %166 = vmatprep.subr.bf16.mxu0 0
    %167 = vmatpush2.bf16.msra.mxu0 %v116
    %168 = vmatprep.mubr.bf16.mxu0 %v134
    %169 = vmatmul.mubr.bf16.gmra.mxu0 %v57
    %v170 = vpop.f32.mrf.mxu0
    %v171 = vadd.f32 0.0, %v170
    %v172 = vpop.f32.mrf.mxu0
    %v173 = vpop.f32.mrf.mxu0
    %v174 = vadd.f32 0.0, %v173
    %v175 = vpop.f32.mrf.mxu0
    %176 = vdwg.mxu0
    %v177 = vadd.f32 %v23, %v171
    %v178 = vadd.f32 %v24, %v174
    %vm179 = vcmask 261120
    %180 = vst.msk [vmem:[#allocation2] sm:$0xff] %vm179, %v177
    %181 = vst.msk [vmem:[#allocation2 + $0x8] sm:$0xff] %vm179, %v178
    // Predicated region
    $region18: #{tpu_custom_call.1} parent=1 // pred_check
      %p182 = pneg %p16
    $region19: #{tpu_custom_call.1} parent=1 // pred_check_branch
      %184 = sbr.rel (%p182) target = $region21
    $region20: #{tpu_custom_call.1} parent=1 // pred_region
      %v185 = vld [vmem:[#allocation2] sm:$0xff]
      %v186 = vld [vmem:[#allocation2 + $0x8] sm:$0xff]
      %v187 = vld [vmem:[%s2] sm:$0x1]
      %v189 = vlaneseq
      %v190 = vshrl.u32 %v189, 7
      %v191 = vsub.s32 0, %v190
      %v192 = vrot.slane %v187, %v191
      %v194 = vadd.f32 %v185, %v192
      %v195 = vadd.f32 %v186, %v192
      %196 = vst.msk [vmem:[#allocation3] sm:$0xff] %vm179, %v194
      %197 = vst.msk [vmem:[#allocation3 + $0x8] sm:$0xff] %vm179, %v195
    $region21: #{tpu_custom_call.1} parent=1 // pred_fallthru
      _
    // Predicated region
    $region22: #{tpu_custom_call.1} parent=1 // pred_check
      _
    $region23: #{tpu_custom_call.1} parent=1 // pred_check_branch
      %199 = sbr.rel (0) target = $region25
    $region24: #{tpu_custom_call.1} parent=1 // pred_region
      %s201 = ssub.s32 256, 256
      %202 = vsyncadd [#allocation4], %s201
      %s203 = sshll.u32 [#allocation3], 4
      %s204 = int_to_ptr.vmem [resolvable:$true] %s203
      %209 = dma.vmem_to_hbm [thread:$0]  %s204, 256, %s3, [#allocation4], 128, 128, 8
    $region25: #{tpu_custom_call.1} parent=1 // pred_fallthru
      _
    // Predicated region
    $region26: #{tpu_custom_call.1} parent=1 // pred_check
      _
    $region27: #{tpu_custom_call.1} parent=1 // pred_check_branch
      %211 = sbr.rel (0) target = $region29
    $region28: #{tpu_custom_call.1} parent=1 // pred_region
      %212 = dma.done [#allocation4], 256
    $region29: #{tpu_custom_call.1} parent=1 // pred_fallthru
      _
    %213 = vsyncpa [#allocation4], 1

</llo_original>
